<compile_context>
chip_gen: v7x
topology: tpu7x:2x2x1
jax: 0.10.0
libtpu: 0.0.40
codegen_flags: <defaults>
</compile_context>

<pallas_src>
import functools

import jax
import jax.numpy as jnp
from jax.experimental import pallas as pl
from jax.experimental.pallas import tpu as pltpu


# ---------------------------------------------------------------------------
# Kernels
# ---------------------------------------------------------------------------

def _ln_rows_kernel(x_ref, a_ref, b_ref, o_ref, *, n, eps):
    """One LayerNorm row per sublane; last dim is the full d_hid."""
    x = x_ref[...].astype(jnp.float32)                        # (tile_rows, d_hid)
    # One-pass statistics: both lane reductions can overlap the next load.
    sum_x = jnp.sum(x, axis=-1, keepdims=True)
    sum_x2 = jnp.sum(x * x, axis=-1, keepdims=True)
    mu = sum_x * jnp.float32(1.0 / n)
    var = (sum_x2 - mu * sum_x) * jnp.float32(1.0 / (n - 1))  # unbiased (torch.std)
    var = jnp.maximum(var, 0.0)                               # cancellation guard
    # sqrt + reciprocal on the narrow column go to the EUP slot; the full-tile
    # divide becomes a single VPU multiply.
    inv = pl.reciprocal(jnp.sqrt(var) + jnp.float32(eps), approx=False)
    out = (x - mu) * inv * a_ref[...] + b_ref[...]
    o_ref[...] = out.astype(o_ref.dtype)


def _ln_packed_kernel(x_ref, a_ref, b_ref, m_ref, o_ref, *, n, eps):
    """k = width // n LayerNorm rows packed into the lane-dense last dim.

    m_ref is a (width, width) block-diagonal "mean" matrix (1/n inside each
    d_hid-wide segment, 0 elsewhere), so  x @ M  is the per-segment mean
    broadcast back to every lane of its segment.  Both statistic reductions run
    on the MXU, which is otherwise idle in this memory-bound kernel.
    """
    x = x_ref[...].astype(jnp.float32)                        # (tile_rows, width)
    m = m_ref[...]
    mean_b = jnp.dot(x, m, preferred_element_type=jnp.float32,
                     precision=jax.lax.Precision.HIGHEST)
    meansq_b = jnp.dot(x * x, m, preferred_element_type=jnp.float32,
                       precision=jax.lax.Precision.HIGHEST)
    var = (meansq_b - mean_b * mean_b) * jnp.float32(n / (n - 1.0))   # unbiased
    var = jnp.maximum(var, 0.0)                               # cancellation guard
    inv = pl.reciprocal(jnp.sqrt(var) + jnp.float32(eps), approx=False)
    out = (x - mean_b) * inv * a_ref[...] + b_ref[...]
    o_ref[...] = out.astype(o_ref.dtype)


# ---------------------------------------------------------------------------
# Tiling policy
# ---------------------------------------------------------------------------

_TARGET_BLOCK_BYTES = 4 * 1024 * 1024   # ~2-4 MiB blocks already hit ~85% HBM roofline
_MAX_TILE_ROWS = 1024
_MIN_GRID_STEPS = 4                     # keep v7x's 2 TCs fed + DMA/compute overlap


def _round_up(x, m):
    return ((x + m - 1) // m) * m


def _min_sublane(*dtypes):
    """Minimum legal/efficient sublane tile for the given dtypes."""
    m = 8
    for dt in dtypes:
        sz = jnp.dtype(dt).itemsize
        if sz == 2:
            m = max(m, 16)
        elif sz <= 1:
            m = max(m, 32)
    return m


def _pick_tile_rows(rows, width, in_dtype, out_dtype):
    min_sub = _min_sublane(in_dtype, out_dtype)
    in_bytes = jnp.dtype(in_dtype).itemsize
    # ~4 MiB input block, clamped to min_sub..1024 rows, rounded to sublanes.
    target = _TARGET_BLOCK_BYTES // max(in_bytes * width, 1)
    target = max(min_sub, min(_MAX_TILE_ROWS, target))
    target = (target // min_sub) * min_sub
    # Never let the grid collapse to one step when rows allow >= _MIN_GRID_STEPS.
    per_split = _round_up(-(-rows // _MIN_GRID_STEPS), min_sub)
    tile = max(min(target, per_split), min_sub)
    if tile >= rows:
        return rows          # full extent: always a legal block dimension
    return tile


def _clamp_user_tile_rows(tile_rows, rows, in_dtype, out_dtype):
    min_sub = _min_sublane(in_dtype, out_dtype)
    tile = min(int(tile_rows), rows)
    tile = max(min_sub, (tile // min_sub) * min_sub)
    return rows if tile >= rows else tile


def _vmem_limit_bytes(tile_rows, width, in_dtype, out_dtype, const_bytes):
    """Footprint-derived scoped-VMEM request (block + margin, not 'all of VMEM')."""
    in_b = jnp.dtype(in_dtype).itemsize
    out_b = jnp.dtype(out_dtype).itemsize
    blk = tile_rows * width
    # Dtype-aware: double-buffered input + double-buffered output + ~4
    # tile-sized f32 in-kernel temporaries + the small constant operands.
    footprint = blk * (2 * in_b + 2 * out_b + 4 * 4) + 2 * const_bytes
    limit = footprint + max(footprint // 2, 2 * 1024 * 1024)   # >= 2 MiB headroom
    return int(max(limit, 8 * 1024 * 1024))


def _pick_pack_factor(rows, d_hid):
    """Largest k with k*d_hid <= 128, k | (128/d_hid) and k | rows (1 = no packing)."""
    if d_hid >= 128 or 128 % d_hid != 0:
        return 1
    k = 128 // d_hid
    while k > 1 and rows % k != 0:
        k //= 2
    return max(k, 1)


# ---------------------------------------------------------------------------
# Wrapper
# ---------------------------------------------------------------------------

def layer_normalization(z, a_2, b_2, *, eps=1e-3, affine=True, tile_rows=None):
    """Pallas implementation of LayerNormalization.forward.

    z: (..., d_hid).  a_2, b_2: (d_hid,) (ignored when affine=False).
    """
    d_hid = z.shape[-1]
    if d_hid == 1:
        return z                                   # matches the PyTorch early-return

    orig_shape = z.shape
    rows = 1
    for s in orig_shape[:-1]:
        rows *= s
    in_dtype = z.dtype
    out_dtype = z.dtype

    # Pre-cast affine params to f32 once (no per-grid-step casts in-kernel).
    if affine:
        a_f32 = a_2.reshape(d_hid).astype(jnp.float32)
        b_f32 = b_2.reshape(d_hid).astype(jnp.float32)
    else:
        a_f32 = jnp.ones((d_hid,), jnp.float32)
        b_f32 = jnp.zeros((d_hid,), jnp.float32)

    k = _pick_pack_factor(rows, d_hid)

    if k > 1:
        # ---- lane-packed path (d_hid < 128): k rows per lane-dense slab ----
        width = k * d_hid
        prows = rows // k
        x2d = z.reshape(prows, width)              # free reshape (row-major)
        a_pk = jnp.tile(a_f32, k).reshape(1, width)
        b_pk = jnp.tile(b_f32, k).reshape(1, width)
        seg = jnp.arange(width, dtype=jnp.int32) // d_hid
        mean_mat = (seg[:, None] == seg[None, :]).astype(jnp.float32) / d_hid

        if tile_rows is None:
            tile = _pick_tile_rows(prows, width, in_dtype, out_dtype)
        else:
            tile = _clamp_user_tile_rows(tile_rows, prows, in_dtype, out_dtype)
        const_bytes = (width * width + 2 * width) * 4
        vmem_limit = _vmem_limit_bytes(tile, width, in_dtype, out_dtype, const_bytes)
        grid = (pl.cdiv(prows, tile),)

        kernel = functools.partial(_ln_packed_kernel, n=d_hid, eps=float(eps))
        out2d = pl.pallas_call(
            kernel,
            out_shape=jax.ShapeDtypeStruct((prows, width), out_dtype),
            grid_spec=pltpu.PrefetchScalarGridSpec(
                num_scalar_prefetch=0,
                grid=grid,
                in_specs=[
                    pl.BlockSpec((tile, width), lambda i: (i, 0)),
                    pl.BlockSpec((1, width), lambda i: (0, 0)),
                    pl.BlockSpec((1, width), lambda i: (0, 0)),
                    pl.BlockSpec((width, width), lambda i: (0, 0)),
                ],
                out_specs=pl.BlockSpec((tile, width), lambda i: (i, 0)),
            ),
            compiler_params=pltpu.CompilerParams(
                dimension_semantics=("parallel",),
                vmem_limit_bytes=vmem_limit,
            ),
        )(x2d, a_pk, b_pk, mean_mat)
        return out2d.reshape(orig_shape)

    # ---- one-row-per-sublane path (d_hid >= 128, or rows not packable) ----
    # (When d_hid < 128 lands here, stores are masked — acceptable fallback.)
    x2d = z.reshape(rows, d_hid)
    a2d = a_f32.reshape(1, d_hid)
    b2d = b_f32.reshape(1, d_hid)

    if tile_rows is None:
        tile = _pick_tile_rows(rows, d_hid, in_dtype, out_dtype)
    else:
        tile = _clamp_user_tile_rows(tile_rows, rows, in_dtype, out_dtype)
    const_bytes = 2 * d_hid * 4
    vmem_limit = _vmem_limit_bytes(tile, d_hid, in_dtype, out_dtype, const_bytes)
    # Ragged last block handled by Pallas (no jnp.pad HBM copy); rows are
    # independent, so padded garbage never reaches a valid output row.
    grid = (pl.cdiv(rows, tile),)

    kernel = functools.partial(_ln_rows_kernel, n=d_hid, eps=float(eps))
    out2d = pl.pallas_call(
        kernel,
        out_shape=jax.ShapeDtypeStruct((rows, d_hid), out_dtype),
        grid_spec=pltpu.PrefetchScalarGridSpec(
            num_scalar_prefetch=0,
            grid=grid,
            in_specs=[
                pl.BlockSpec((tile, d_hid), lambda i: (i, 0)),
                pl.BlockSpec((1, d_hid), lambda i: (0, 0)),
                pl.BlockSpec((1, d_hid), lambda i: (0, 0)),
            ],
            out_specs=pl.BlockSpec((tile, d_hid), lambda i: (i, 0)),
        ),
        compiler_params=pltpu.CompilerParams(
            dimension_semantics=("parallel",),
            vmem_limit_bytes=vmem_limit,
        ),
    )(x2d, a2d, b2d)
    return out2d.reshape(orig_shape)


# ---------------------------------------------------------------------------
# Pure-JAX reference (mirrors the PyTorch forward: unbiased std, eps on sigma)
# ---------------------------------------------------------------------------

def _reference(z, a_2, b_2, eps=1e-3):
    z = z.astype(jnp.float32)
    mu = jnp.mean(z, axis=-1, keepdims=True)
    n = z.shape[-1]
    var = jnp.sum((z - mu) ** 2, axis=-1, keepdims=True) / (n - 1)
    sigma = jnp.sqrt(var)
    out = (z - mu) / (sigma + eps)
    return out * a_2 + b_2


if __name__ == "__main__":
    batch, seq, d_hid = 2, 8, 32
    z = jax.random.normal(jax.random.PRNGKey(0), (batch, seq, d_hid), dtype=jnp.float32)

    # nn.Parameter(torch.ones(d_hid)) / nn.Parameter(torch.zeros(d_hid))
    a_2 = jnp.ones((d_hid,), dtype=jnp.float32)
    b_2 = jnp.zeros((d_hid,), dtype=jnp.float32)

    # Main case: d_hid=32 -> lane-packed path (k=4, width=128).
    out = jax.block_until_ready(layer_normalization(z, a_2, b_2, eps=1e-3, affine=True))
    assert out.shape == z.shape
    assert jnp.allclose(out, _reference(z, a_2, b_2, eps=1e-3),
                        atol=1e-5, rtol=1e-5), "packed path mismatch vs reference"

    # Ragged row count not divisible by the pack factor -> unpacked fallback,
    # ragged last block handled by Pallas (no padding copy).
    z2 = jax.random.normal(jax.random.PRNGKey(1), (3, 7, d_hid), dtype=jnp.float32)
    out2 = jax.block_until_ready(
        layer_normalization(z2, a_2, b_2, eps=1e-3, affine=True, tile_rows=8))
    assert jnp.allclose(out2, _reference(z2, a_2, b_2, eps=1e-3),
                        atol=1e-5, rtol=1e-5), "ragged/unpacked path mismatch"

    # Packed path with a multi-step grid (exercises pipelining / >=2 tiles).
    z3 = jax.random.normal(jax.random.PRNGKey(2), (4, 16, d_hid), dtype=jnp.float32)
    out3 = jax.block_until_ready(layer_normalization(z3, a_2, b_2, eps=1e-3, affine=True))
    assert jnp.allclose(out3, _reference(z3, a_2, b_2, eps=1e-3),
                        atol=1e-5, rtol=1e-5), "multi-tile packed path mismatch"

    # bf16 input: exercises the dtype-aware (16-row) sublane tiling.
    z4 = jax.random.normal(jax.random.PRNGKey(3), (2, 64, d_hid)).astype(jnp.bfloat16)
    out4 = jax.block_until_ready(layer_normalization(z4, a_2, b_2, eps=1e-3, affine=True))
    assert jnp.allclose(out4.astype(jnp.float32), _reference(z4, a_2, b_2, eps=1e-3),
                        atol=3e-2, rtol=3e-2), "bf16 path mismatch"

    print("KERNEL_OK")
</pallas_src>

<mosaic_0001>
module attributes {stable_mosaic.version = 11 : i64} {
  func.func @_ln_packed_kernel(%arg0: i32, %arg1: memref<4x128xf32, #tpu.memory_space<vmem>>, %arg2: memref<1x128xf32, #tpu.memory_space<vmem>>, %arg3: memref<1x128xf32, #tpu.memory_space<vmem>>, %arg4: memref<128x128xf32, #tpu.memory_space<vmem>>, %arg5: memref<4x128xf32, #tpu.memory_space<vmem>>) attributes {dimension_semantics = [#tpu.dimension_semantics<parallel>], iteration_bounds = array<i64: 1>, scalar_prefetch = 0 : i64, scratch_operands = 0 : i64, tpu.core_type = #tpu.core_type<tc>, window_params = [{transform_indices = @transform_0, window_bounds = array<i64: 4, 128>}, {pipeline_mode = #tpu.pipeline_mode<synchronous>, transform_indices = @transform_1, window_bounds = array<i64: 1, 128>}, {pipeline_mode = #tpu.pipeline_mode<synchronous>, transform_indices = @transform_2, window_bounds = array<i64: 1, 128>}, {pipeline_mode = #tpu.pipeline_mode<synchronous>, transform_indices = @transform_3, window_bounds = array<i64: 128, 128>}, {transform_indices = @transform_4, window_bounds = array<i64: 4, 128>}]} {
    %c0 = arith.constant 0 : index
    %c0_0 = arith.constant 0 : index
    %0 = vector.load %arg1[%c0, %c0_0] : memref<4x128xf32, #tpu.memory_space<vmem>>, vector<4x128xf32>
    %c0_1 = arith.constant 0 : index
    %c0_2 = arith.constant 0 : index
    %1 = vector.load %arg4[%c0_1, %c0_2] : memref<128x128xf32, #tpu.memory_space<vmem>>, vector<128x128xf32>
    %cst = arith.constant dense<0.000000e+00> : vector<4x128xf32>
    %2 = tpu.matmul %0, %1, %cst {dimension_numbers = #tpu.dot_dimension_numbers<[1], [0], [0], [1], [0, 0, 1, 1], [], []>, precision = #tpu.contract_precision<fp32>} : vector<4x128xf32>, vector<128x128xf32>, vector<4x128xf32> -> vector<4x128xf32>
    %3 = arith.mulf %0, %0 : vector<4x128xf32>
    %cst_3 = arith.constant dense<0.000000e+00> : vector<4x128xf32>
    %4 = tpu.matmul %3, %1, %cst_3 {dimension_numbers = #tpu.dot_dimension_numbers<[1], [0], [0], [1], [0, 0, 1, 1], [], []>, precision = #tpu.contract_precision<fp32>} : vector<4x128xf32>, vector<128x128xf32>, vector<4x128xf32> -> vector<4x128xf32>
    %5 = arith.mulf %2, %2 : vector<4x128xf32>
    %6 = arith.subf %4, %5 : vector<4x128xf32>
    %cst_4 = arith.constant 1.03225803 : f32
    %7 = vector.broadcast %cst_4 : f32 to vector<4x128xf32>
    %8 = arith.mulf %6, %7 : vector<4x128xf32>
    %cst_5 = arith.constant 0.000000e+00 : f32
    %9 = vector.broadcast %cst_5 : f32 to vector<4x128xf32>
    %10 = arith.maximumf %8, %9 : vector<4x128xf32>
    %11 = math.sqrt %10 : vector<4x128xf32>
    %cst_6 = arith.constant 1.000000e-03 : f32
    %12 = vector.broadcast %cst_6 : f32 to vector<4x128xf32>
    %13 = arith.addf %11, %12 : vector<4x128xf32>
    %14 = tpu.reciprocal %13 : vector<4x128xf32> -> vector<4x128xf32>
    %15 = arith.subf %0, %2 : vector<4x128xf32>
    %16 = arith.mulf %15, %14 : vector<4x128xf32>
    %c0_7 = arith.constant 0 : index
    %c0_8 = arith.constant 0 : index
    %17 = vector.load %arg2[%c0_7, %c0_8] : memref<1x128xf32, #tpu.memory_space<vmem>>, vector<1x128xf32>
    %18 = vector.broadcast %17 : vector<1x128xf32> to vector<4x128xf32>
    %19 = arith.mulf %16, %18 : vector<4x128xf32>
    %c0_9 = arith.constant 0 : index
    %c0_10 = arith.constant 0 : index
    %20 = vector.load %arg3[%c0_9, %c0_10] : memref<1x128xf32, #tpu.memory_space<vmem>>, vector<1x128xf32>
    %21 = vector.broadcast %20 : vector<1x128xf32> to vector<4x128xf32>
    %22 = arith.addf %19, %21 : vector<4x128xf32>
    %c0_11 = arith.constant 0 : index
    %c0_12 = arith.constant 0 : index
    %23 = vector.load %arg5[%c0_11, %c0_12] : memref<4x128xf32, #tpu.memory_space<vmem>>, vector<4x128xf32>
    tpu.vector_store %arg5[%c0_11, %c0_12], %22 {strides = array<i32>} : memref<4x128xf32, #tpu.memory_space<vmem>>, vector<4x128xf32>,
    return
  }
  func.func @transform_0(%arg0: i32) -> (i32, i32) {
    %c0_i32 = arith.constant 0 : i32
    %c0_i32_0 = arith.constant 0 : i32
    return %arg0, %c0_i32 : i32, i32
  }
  func.func @transform_1(%arg0: i32) -> (i32, i32) {
    %c0_i32 = arith.constant 0 : i32
    %c0_i32_0 = arith.constant 0 : i32
    %c0_i32_1 = arith.constant 0 : i32
    return %c0_i32, %c0_i32_0 : i32, i32
  }
  func.func @transform_2(%arg0: i32) -> (i32, i32) {
    %c0_i32 = arith.constant 0 : i32
    %c0_i32_0 = arith.constant 0 : i32
    %c0_i32_1 = arith.constant 0 : i32
    return %c0_i32, %c0_i32_0 : i32, i32
  }
  func.func @transform_3(%arg0: i32) -> (i32, i32) {
    %c0_i32 = arith.constant 0 : i32
    %c0_i32_0 = arith.constant 0 : i32
    %c0_i32_1 = arith.constant 0 : i32
    return %c0_i32, %c0_i32_0 : i32, i32
  }
  func.func @transform_4(%arg0: i32) -> (i32, i32) {
    %c0_i32 = arith.constant 0 : i32
    %c0_i32_0 = arith.constant 0 : i32
    return %arg0, %c0_i32 : i32, i32
  }
}

</mosaic_0001>

<llo_original>
// kernel: tpu_custom_call.1
$region0: #{tpu_custom_call.1}
  #allocation0 [shape = 'u32[]', space=smem, size = 0x4, offset = 0x4, fixed_abs, tag = 'smem constant byte address 0x4 - core index']
  #allocation1 [shape = 'u32[144,128]{1,0:T(1,128)}', space=vmem, size = 0x12000, scoped, tag = 'internal scratch']
  %s0 = inlined_call_operand.hbm [shape: f32[4,128], index: 0, kind: input, shape index: {}]
  %s1 = inlined_call_operand.vmem [shape: f32[1,128], index: 1, kind: input, shape index: {}]
  %s2 = inlined_call_operand.vmem [shape: f32[1,128], index: 2, kind: input, shape index: {}]
  %s3 = inlined_call_operand.hbm [shape: f32[128,128], index: 3, kind: input, shape index: {}]
  %s4 = inlined_call_operand.hbm [shape: f32[4,128], index: 4, kind: output, shape index: {}]
  %s5 = sld [smem:[#allocation0]]
  $region34: #{tpu_custom_call.1} parent=0
    _
  %s7 = ssub.s32 1, %s5
  %s8 = scalar_select 0, %s7, %s5
  $region1: #{tpu_custom_call.1} parent=0
    #allocation2 [shape = 'u8[2048]{0}', space=vmem, size = 0x800, scoped, tag = 'input window, operand 0, single buffered']
    #allocation3 [shape = 's32[1]{0}', space=sflag, size = 0x4, scoped, tag = 'scoped memory for tpu_custom_call.1']
    #allocation4 [shape = 's32[1]{0}', space=sflag, size = 0x4, scoped, tag = 'scoped memory for tpu_custom_call.1']
    #allocation5 [shape = 'u8[65536]{0}', space=vmem, size = 0x10000, scoped, tag = 'input window, operand 3, single buffered']
    #allocation6 [shape = 's32[1]{0}', space=sflag, size = 0x4, scoped, tag = 'scoped memory for tpu_custom_call.1']
    #allocation7 [shape = 'u8[2048]{0}', space=vmem, size = 0x800, scoped, tag = 'output window, operand 0, single buffered']
    %9 = vsyncpa [#allocation3], 0
    %10 = vsyncpa [#allocation6], 0
    %11 = vsyncpa [#allocation4], 0
    // Predicated region
    $region2: #{tpu_custom_call.1} parent=1 // pred_check
      _
    $region3: #{tpu_custom_call.1} parent=1 // pred_check_branch
      %13 = sbr.rel (0) target = $region5
    $region4: #{tpu_custom_call.1} parent=1 // pred_region
      %s15 = ssub.s32 64, 64
      %16 = vsyncadd [#allocation3], %s15
      %s18 = sshll.u32 [#allocation2], 4
      %s19 = int_to_ptr.vmem [resolvable:$true] %s18
      %21 = dma.hbm_to_vmem [thread:$0]  %s0, 64, %s19, [#allocation3]
    $region5: #{tpu_custom_call.1} parent=1 // pred_fallthru
      _
    // Predicated region
    $region6: #{tpu_custom_call.1} parent=1 // pred_check
      _
    $region7: #{tpu_custom_call.1} parent=1 // pred_check_branch
      %23 = sbr.rel (0) target = $region9
    $region8: #{tpu_custom_call.1} parent=1 // pred_region
      _
    $region9: #{tpu_custom_call.1} parent=1 // pred_fallthru
      _
    // Predicated region
    $region10: #{tpu_custom_call.1} parent=1 // pred_check
      _
    $region11: #{tpu_custom_call.1} parent=1 // pred_check_branch
      %25 = sbr.rel (0) target = $region13
    $region12: #{tpu_custom_call.1} parent=1 // pred_region
      _
    $region13: #{tpu_custom_call.1} parent=1 // pred_fallthru
      _
    // Predicated region
    $region14: #{tpu_custom_call.1} parent=1 // pred_check
      _
    $region15: #{tpu_custom_call.1} parent=1 // pred_check_branch
      %27 = sbr.rel (0) target = $region17
    $region16: #{tpu_custom_call.1} parent=1 // pred_region
      %s29 = ssub.s32 2048, 2048
      %30 = vsyncadd [#allocation6], %s29
      %s31 = sshll.u32 [#allocation5], 4
      %s32 = int_to_ptr.vmem [resolvable:$true] %s31
      %37 = dma.hbm_to_vmem [thread:$0]  %s3, 2048, %s32, [#allocation6], 128, 128, 8
    $region17: #{tpu_custom_call.1} parent=1 // pred_fallthru
      _
    // Predicated region
    $region18: #{tpu_custom_call.1} parent=1 // pred_check
      _
    $region19: #{tpu_custom_call.1} parent=1 // pred_check_branch
      %39 = sbr.rel (0) target = $region21
    $region20: #{tpu_custom_call.1} parent=1 // pred_region
      %40 = dma.done [#allocation3], 64
    $region21: #{tpu_custom_call.1} parent=1 // pred_fallthru
      _
    // Predicated region
    $region22: #{tpu_custom_call.1} parent=1 // pred_check
      _
    $region23: #{tpu_custom_call.1} parent=1 // pred_check_branch
      %42 = sbr.rel (0) target = $region25
    $region24: #{tpu_custom_call.1} parent=1 // pred_region
      %43 = dma.done [#allocation6], 2048
    $region25: #{tpu_custom_call.1} parent=1 // pred_fallthru
      _
    %v44 = vld [vmem:[#allocation2] sm:$0xf]
    %v45 = vld [vmem:[#allocation5] sm:$0xff]
    %v46 = vld [vmem:[#allocation5 + $0x8] sm:$0xff]
    %v47 = vld [vmem:[#allocation5 + $0x10] sm:$0xff]
    %v48 = vld [vmem:[#allocation5 + $0x18] sm:$0xff]
    %v49 = vld [vmem:[#allocation5 + $0x20] sm:$0xff]
    %v50 = vld [vmem:[#allocation5 + $0x28] sm:$0xff]
    %v51 = vld [vmem:[#allocation5 + $0x30] sm:$0xff]
    %v52 = vld [vmem:[#allocation5 + $0x38] sm:$0xff]
    %v53 = vld [vmem:[#allocation5 + $0x40] sm:$0xff]
    %v54 = vld [vmem:[#allocation5 + $0x48] sm:$0xff]
    %v55 = vld [vmem:[#allocation5 + $0x50] sm:$0xff]
    %v56 = vld [vmem:[#allocation5 + $0x58] sm:$0xff]
    %v57 = vld [vmem:[#allocation5 + $0x60] sm:$0xff]
    %v58 = vld [vmem:[#allocation5 + $0x68] sm:$0xff]
    %v59 = vld [vmem:[#allocation5 + $0x70] sm:$0xff]
    %v60 = vld [vmem:[#allocation5 + $0x78] sm:$0xff]
    %61 = vmatprep.subr.mxu0 0.0
    %v62 = vand.u32 %v45, 4294901760
    %63 = vmatpush1.msra.mxu0 %v62
    %64 = vmatprep.subr.mxu0 0.0
    %v65 = vand.u32 %v46, 4294901760
    %66 = vmatpush1.msra.mxu0 %v65
    %67 = vmatprep.subr.mxu0 0.0
    %v68 = vand.u32 %v47, 4294901760
    %69 = vmatpush1.msra.mxu0 %v68
    %70 = vmatprep.subr.mxu0 0.0
    %v71 = vand.u32 %v48, 4294901760
    %72 = vmatpush1.msra.mxu0 %v71
    %73 = vmatprep.subr.mxu0 0.0
    %v74 = vand.u32 %v49, 4294901760
    %75 = vmatpush1.msra.mxu0 %v74
    %76 = vmatprep.subr.mxu0 0.0
    %v77 = vand.u32 %v50, 4294901760
    %78 = vmatpush1.msra.mxu0 %v77
    %79 = vmatprep.subr.mxu0 0.0
    %v80 = vand.u32 %v51, 4294901760
    %81 = vmatpush1.msra.mxu0 %v80
    %82 = vmatprep.subr.mxu0 0.0
    %v83 = vand.u32 %v52, 4294901760
    %84 = vmatpush1.msra.mxu0 %v83
    %85 = vmatprep.subr.mxu0 0.0
    %v86 = vand.u32 %v53, 4294901760
    %87 = vmatpush1.msra.mxu0 %v86
    %88 = vmatprep.subr.mxu0 0.0
    %v89 = vand.u32 %v54, 4294901760
    %90 = vmatpush1.msra.mxu0 %v89
    %91 = vmatprep.subr.mxu0 0.0
    %v92 = vand.u32 %v55, 4294901760
    %93 = vmatpush1.msra.mxu0 %v92
    %94 = vmatprep.subr.mxu0 0.0
    %v95 = vand.u32 %v56, 4294901760
    %96 = vmatpush1.msra.mxu0 %v95
    %97 = vmatprep.subr.mxu0 0.0
    %v98 = vand.u32 %v57, 4294901760
    %99 = vmatpush1.msra.mxu0 %v98
    %100 = vmatprep.subr.mxu0 0.0
    %v101 = vand.u32 %v58, 4294901760
    %102 = vmatpush1.msra.mxu0 %v101
    %103 = vmatprep.subr.mxu0 0.0
    %v104 = vand.u32 %v59, 4294901760
    %105 = vmatpush1.msra.mxu0 %v104
    %106 = vmatprep.subr.mxu0 0.0
    %v107 = vand.u32 %v60, 4294901760
    %108 = vmatpush1.msra.mxu0 %v107
    %109 = vmatprep.subr.mxu0 0.0
    %110 = vmatpush1.msra.mxu0 0.0
    %111 = vmatprep.subr.mxu0 0.0
    %112 = vmatpush1.msra.mxu0 0.0
    %113 = vmatprep.subr.mxu0 0.0
    %114 = vmatpush1.msra.mxu0 0.0
    %115 = vmatprep.subr.mxu0 0.0
    %116 = vmatpush1.msra.mxu0 0.0
    %117 = vmatprep.subr.mxu0 0.0
    %118 = vmatpush1.msra.mxu0 0.0
    %119 = vmatprep.subr.mxu0 0.0
    %120 = vmatpush1.msra.mxu0 0.0
    %121 = vmatprep.subr.mxu0 0.0
    %122 = vmatpush1.msra.mxu0 0.0
    %123 = vmatprep.subr.mxu0 0.0
    %124 = vmatpush1.msra.mxu0 0.0
    %125 = vmatprep.subr.mxu0 0.0
    %126 = vmatpush1.msra.mxu0 0.0
    %127 = vmatprep.subr.mxu0 0.0
    %128 = vmatpush1.msra.mxu0 0.0
    %129 = vmatprep.subr.mxu0 0.0
    %130 = vmatpush1.msra.mxu0 0.0
    %131 = vmatprep.subr.mxu0 0.0
    %132 = vmatpush1.msra.mxu0 0.0
    %133 = vmatprep.subr.mxu0 0.0
    %134 = vmatpush1.msra.mxu0 0.0
    %135 = vmatprep.subr.mxu0 0.0
    %136 = vmatpush1.msra.mxu0 0.0
    %137 = vmatprep.subr.mxu0 0.0
    %138 = vmatpush1.msra.mxu0 0.0
    %139 = vmatprep.subr.mxu0 0.0
    %140 = vmatpush1.msra.mxu0 0.0
    %141 = vmatprep.mubr.f32.mxu0 0.0
    %v142 = vand.u32 %v44, 4294901760
    %v143 = vsub.f32 %v44, %v142
    %v144 = vand.u32 %v143, 4294901760
    %v145 = vsub.f32 %v143, %v144
    %v146 = vand.u32 %v145, 4294901760
    %147 = vmatmul.mubr.f32.gmra.mrb[0].mxu0 %v146
    %v148 = vpop.f32.mrb[0].mxu0
    %v149 = vadd.f32 0.0, %v148
    %v150 = vpop.f32.mrb[0].mxu0
    %151 = vdwg.mxu0
    %152 = vmatprep.subr.mxu0 0.0
    %v153 = vand.u32 %v45, 4294901760
    %v154 = vsub.f32 %v45, %v153
    %v155 = vand.u32 %v154, 4294901760
    %v156 = vsub.f32 %v154, %v155
    %v157 = vand.u32 %v156, 4294901760
    %158 = vmatpush1.msra.mxu0 %v157
    %159 = vmatprep.subr.mxu0 0.0
    %v160 = vand.u32 %v46, 4294901760
    %v161 = vsub.f32 %v46, %v160
    %v162 = vand.u32 %v161, 4294901760
    %v163 = vsub.f32 %v161, %v162
    %v164 = vand.u32 %v163, 4294901760
    %165 = vmatpush1.msra.mxu0 %v164
    %166 = vmatprep.subr.mxu0 0.0
    %v167 = vand.u32 %v47, 4294901760
    %v168 = vsub.f32 %v47, %v167
    %v169 = vand.u32 %v168, 4294901760
    %v170 = vsub.f32 %v168, %v169
    %v171 = vand.u32 %v170, 4294901760
    %172 = vmatpush1.msra.mxu0 %v171
    %173 = vmatprep.subr.mxu0 0.0
    %v174 = vand.u32 %v48, 4294901760
    %v175 = vsub.f32 %v48, %v174
    %v176 = vand.u32 %v175, 4294901760
    %v177 = vsub.f32 %v175, %v176
    %v178 = vand.u32 %v177, 4294901760
    %179 = vmatpush1.msra.mxu0 %v178
    %180 = vmatprep.subr.mxu0 0.0
    %v181 = vand.u32 %v49, 4294901760
    %v182 = vsub.f32 %v49, %v181
    %v183 = vand.u32 %v182, 4294901760
    %v184 = vsub.f32 %v182, %v183
    %v185 = vand.u32 %v184, 4294901760
    %186 = vmatpush1.msra.mxu0 %v185
    %187 = vmatprep.subr.mxu0 0.0
    %v188 = vand.u32 %v50, 4294901760
    %v189 = vsub.f32 %v50, %v188
    %v190 = vand.u32 %v189, 4294901760
    %v191 = vsub.f32 %v189, %v190
    %v192 = vand.u32 %v191, 4294901760
    %193 = vmatpush1.msra.mxu0 %v192
    %194 = vmatprep.subr.mxu0 0.0
    %v195 = vand.u32 %v51, 4294901760
    %v196 = vsub.f32 %v51, %v195
    %v197 = vand.u32 %v196, 4294901760
    %v198 = vsub.f32 %v196, %v197
    %v199 = vand.u32 %v198, 4294901760
    %200 = vmatpush1.msra.mxu0 %v199
    %201 = vmatprep.subr.mxu0 0.0
    %v202 = vand.u32 %v52, 4294901760
    %v203 = vsub.f32 %v52, %v202
    %v204 = vand.u32 %v203, 4294901760
    %v205 = vsub.f32 %v203, %v204
    %v206 = vand.u32 %v205, 4294901760
    %207 = vmatpush1.msra.mxu0 %v206
    %208 = vmatprep.subr.mxu0 0.0
    %v209 = vand.u32 %v53, 4294901760
    %v210 = vsub.f32 %v53, %v209
    %v211 = vand.u32 %v210, 4294901760
    %v212 = vsub.f32 %v210, %v211
    %v213 = vand.u32 %v212, 4294901760
    %214 = vmatpush1.msra.mxu0 %v213
    %215 = vmatprep.subr.mxu0 0.0
    %v216 = vand.u32 %v54, 4294901760
    %v217 = vsub.f32 %v54, %v216
    %v218 = vand.u32 %v217, 4294901760
    %v219 = vsub.f32 %v217, %v218
    %v220 = vand.u32 %v219, 4294901760
    %221 = vmatpush1.msra.mxu0 %v220
    %222 = vmatprep.subr.mxu0 0.0
    %v223 = vand.u32 %v55, 4294901760
    %v224 = vsub.f32 %v55, %v223
    %v225 = vand.u32 %v224, 4294901760
    %v226 = vsub.f32 %v224, %v225
    %v227 = vand.u32 %v226, 4294901760
    %228 = vmatpush1.msra.mxu0 %v227
    %229 = vmatprep.subr.mxu0 0.0
    %v230 = vand.u32 %v56, 4294901760
    %v231 = vsub.f32 %v56, %v230
    %v232 = vand.u32 %v231, 4294901760
    %v233 = vsub.f32 %v231, %v232
    %v234 = vand.u32 %v233, 4294901760
    %235 = vmatpush1.msra.mxu0 %v234
    %236 = vmatprep.subr.mxu0 0.0
    %v237 = vand.u32 %v57, 4294901760
    %v238 = vsub.f32 %v57, %v237
    %v239 = vand.u32 %v238, 4294901760
    %v240 = vsub.f32 %v238, %v239
    %v241 = vand.u32 %v240, 4294901760
    %242 = vmatpush1.msra.mxu0 %v241
    %243 = vmatprep.subr.mxu0 0.0
    %v244 = vand.u32 %v58, 4294901760
    %v245 = vsub.f32 %v58, %v244
    %v246 = vand.u32 %v245, 4294901760
    %v247 = vsub.f32 %v245, %v246
    %v248 = vand.u32 %v247, 4294901760
    %249 = vmatpush1.msra.mxu0 %v248
    %250 = vmatprep.subr.mxu0 0.0
    %v251 = vand.u32 %v59, 4294901760
    %v252 = vsub.f32 %v59, %v251
    %v253 = vand.u32 %v252, 4294901760
    %v254 = vsub.f32 %v252, %v253
    %v255 = vand.u32 %v254, 4294901760
    %256 = vmatpush1.msra.mxu0 %v255
    %257 = vmatprep.subr.mxu0 0.0
    %v258 = vand.u32 %v60, 4294901760
    %v259 = vsub.f32 %v60, %v258
    %v260 = vand.u32 %v259, 4294901760
    %v261 = vsub.f32 %v259, %v260
    %v262 = vand.u32 %v261, 4294901760
    %263 = vmatpush1.msra.mxu0 %v262
    %264 = vmatprep.subr.mxu0 0.0
    %265 = vmatpush1.msra.mxu0 0.0
    %266 = vmatprep.subr.mxu0 0.0
    %267 = vmatpush1.msra.mxu0 0.0
    %268 = vmatprep.subr.mxu0 0.0
    %269 = vmatpush1.msra.mxu0 0.0
    %270 = vmatprep.subr.mxu0 0.0
    %271 = vmatpush1.msra.mxu0 0.0
    %272 = vmatprep.subr.mxu0 0.0
    %273 = vmatpush1.msra.mxu0 0.0
    %274 = vmatprep.subr.mxu0 0.0
    %275 = vmatpush1.msra.mxu0 0.0
    %276 = vmatprep.subr.mxu0 0.0
    %277 = vmatpush1.msra.mxu0 0.0
    %278 = vmatprep.subr.mxu0 0.0
    %279 = vmatpush1.msra.mxu0 0.0
    %280 = vmatprep.subr.mxu0 0.0
    %281 = vmatpush1.msra.mxu0 0.0
    %282 = vmatprep.subr.mxu0 0.0
    %283 = vmatpush1.msra.mxu0 0.0
    %284 = vmatprep.subr.mxu0 0.0
    %285 = vmatpush1.msra.mxu0 0.0
    %286 = vmatprep.subr.mxu0 0.0
    %287 = vmatpush1.msra.mxu0 0.0
    %288 = vmatprep.subr.mxu0 0.0
    %289 = vmatpush1.msra.mxu0 0.0
    %290 = vmatprep.subr.mxu0 0.0
    %291 = vmatpush1.msra.mxu0 0.0
    %292 = vmatprep.subr.mxu0 0.0
    %293 = vmatpush1.msra.mxu0 0.0
    %294 = vmatprep.subr.mxu0 0.0
    %295 = vmatpush1.msra.mxu0 0.0
    %296 = vmatprep.mubr.f32.mxu0 0.0
    %v297 = vand.u32 %v44, 4294901760
    %298 = vmatmul.mubr.f32.gmra.mrb[0].mxu0 %v297
    %v299 = vpop.f32.mrb[0].mxu0
    %v300 = vadd.f32 %v149, %v299
    %v301 = vpop.f32.mrb[0].mxu0
    %302 = vdwg.mxu0
    %303 = vmatprep.subr.mxu0 0.0
    %v304 = vand.u32 %v45, 4294901760
    %v305 = vsub.f32 %v45, %v304
    %306 = vmatpush1.msra.mxu0 %v305
    %307 = vmatprep.subr.mxu0 0.0
    %v308 = vand.u32 %v46, 4294901760
    %v309 = vsub.f32 %v46, %v308
    %310 = vmatpush1.msra.mxu0 %v309
    %311 = vmatprep.subr.mxu0 0.0
    %v312 = vand.u32 %v47, 4294901760
    %v313 = vsub.f32 %v47, %v312
    %314 = vmatpush1.msra.mxu0 %v313
    %315 = vmatprep.subr.mxu0 0.0
    %v316 = vand.u32 %v48, 4294901760
    %v317 = vsub.f32 %v48, %v316
    %318 = vmatpush1.msra.mxu0 %v317
    %319 = vmatprep.subr.mxu0 0.0
    %v320 = vand.u32 %v49, 4294901760
    %v321 = vsub.f32 %v49, %v320
    %322 = vmatpush1.msra.mxu0 %v321
    %323 = vmatprep.subr.mxu0 0.0
    %v324 = vand.u32 %v50, 4294901760
    %v325 = vsub.f32 %v50, %v324
    %326 = vmatpush1.msra.mxu0 %v325
    %327 = vmatprep.subr.mxu0 0.0
    %v328 = vand.u32 %v51, 4294901760
    %v329 = vsub.f32 %v51, %v328
    %330 = vmatpush1.msra.mxu0 %v329
    %331 = vmatprep.subr.mxu0 0.0
    %v332 = vand.u32 %v52, 4294901760
    %v333 = vsub.f32 %v52, %v332
    %334 = vmatpush1.msra.mxu0 %v333
    %335 = vmatprep.subr.mxu0 0.0
    %v336 = vand.u32 %v53, 4294901760
    %v337 = vsub.f32 %v53, %v336
    %338 = vmatpush1.msra.mxu0 %v337
    %339 = vmatprep.subr.mxu0 0.0
    %v340 = vand.u32 %v54, 4294901760
    %v341 = vsub.f32 %v54, %v340
    %342 = vmatpush1.msra.mxu0 %v341
    %343 = vmatprep.subr.mxu0 0.0
    %v344 = vand.u32 %v55, 4294901760
    %v345 = vsub.f32 %v55, %v344
    %346 = vmatpush1.msra.mxu0 %v345
    %347 = vmatprep.subr.mxu0 0.0
    %v348 = vand.u32 %v56, 4294901760
    %v349 = vsub.f32 %v56, %v348
    %350 = vmatpush1.msra.mxu0 %v349
    %351 = vmatprep.subr.mxu0 0.0
    %v352 = vand.u32 %v57, 4294901760
    %v353 = vsub.f32 %v57, %v352
    %354 = vmatpush1.msra.mxu0 %v353
    %355 = vmatprep.subr.mxu0 0.0
    %v356 = vand.u32 %v58, 4294901760
    %v357 = vsub.f32 %v58, %v356
    %358 = vmatpush1.msra.mxu0 %v357
    %359 = vmatprep.subr.mxu0 0.0
    %v360 = vand.u32 %v59, 4294901760
    %v361 = vsub.f32 %v59, %v360
    %362 = vmatpush1.msra.mxu0 %v361
    %363 = vmatprep.subr.mxu0 0.0
    %v364 = vand.u32 %v60, 4294901760
    %v365 = vsub.f32 %v60, %v364
    %366 = vmatpush1.msra.mxu0 %v365
    %367 = vmatprep.subr.mxu0 0.0
    %368 = vmatpush1.msra.mxu0 0.0
    %369 = vmatprep.subr.mxu0 0.0
    %370 = vmatpush1.msra.mxu0 0.0
    %371 = vmatprep.subr.mxu0 0.0
    %372 = vmatpush1.msra.mxu0 0.0
    %373 = vmatprep.subr.mxu0 0.0
    %374 = vmatpush1.msra.mxu0 0.0
    %375 = vmatprep.subr.mxu0 0.0
    %376 = vmatpush1.msra.mxu0 0.0
    %377 = vmatprep.subr.mxu0 0.0
    %378 = vmatpush1.msra.mxu0 0.0
    %379 = vmatprep.subr.mxu0 0.0
    %380 = vmatpush1.msra.mxu0 0.0
    %381 = vmatprep.subr.mxu0 0.0
    %382 = vmatpush1.msra.mxu0 0.0
    %383 = vmatprep.subr.mxu0 0.0
    %384 = vmatpush1.msra.mxu0 0.0
    %385 = vmatprep.subr.mxu0 0.0
    %386 = vmatpush1.msra.mxu0 0.0
    %387 = vmatprep.subr.mxu0 0.0
    %388 = vmatpush1.msra.mxu0 0.0
    %389 = vmatprep.subr.mxu0 0.0
    %390 = vmatpush1.msra.mxu0 0.0
    %391 = vmatprep.subr.mxu0 0.0
    %392 = vmatpush1.msra.mxu0 0.0
    %393 = vmatprep.subr.mxu0 0.0
    %394 = vmatpush1.msra.mxu0 0.0
    %395 = vmatprep.subr.mxu0 0.0
    %396 = vmatpush1.msra.mxu0 0.0
    %397 = vmatprep.subr.mxu0 0.0
    %398 = vmatpush1.msra.mxu0 0.0
    %399 = vmatprep.mubr.f32.mxu0 0.0
    %v400 = vand.u32 %v44, 4294901760
    %v401 = vsub.f32 %v44, %v400
    %402 = vmatmul.mubr.f32.gmra.mrb[0].mxu0 %v401
    %v403 = vpop.f32.mrb[0].mxu0
    %v404 = vadd.f32 %v300, %v403
    %v405 = vpop.f32.mrb[0].mxu0
    %406 = vdwg.mxu0
    %407 = vmatprep.subr.mxu0 0.0
    %v408 = vand.u32 %v45, 4294901760
    %409 = vmatpush1.msra.mxu0 %v408
    %410 = vmatprep.subr.mxu0 0.0
    %v411 = vand.u32 %v46, 4294901760
    %412 = vmatpush1.msra.mxu0 %v411
    %413 = vmatprep.subr.mxu0 0.0
    %v414 = vand.u32 %v47, 4294901760
    %415 = vmatpush1.msra.mxu0 %v414
    %416 = vmatprep.subr.mxu0 0.0
    %v417 = vand.u32 %v48, 4294901760
    %418 = vmatpush1.msra.mxu0 %v417
    %419 = vmatprep.subr.mxu0 0.0
    %v420 = vand.u32 %v49, 4294901760
    %421 = vmatpush1.msra.mxu0 %v420
    %422 = vmatprep.subr.mxu0 0.0
    %v423 = vand.u32 %v50, 4294901760
    %424 = vmatpush1.msra.mxu0 %v423
    %425 = vmatprep.subr.mxu0 0.0
    %v426 = vand.u32 %v51, 4294901760
    %427 = vmatpush1.msra.mxu0 %v426
    %428 = vmatprep.subr.mxu0 0.0
    %v429 = vand.u32 %v52, 4294901760
    %430 = vmatpush1.msra.mxu0 %v429
    %431 = vmatprep.subr.mxu0 0.0
    %v432 = vand.u32 %v53, 4294901760
    %433 = vmatpush1.msra.mxu0 %v432
    %434 = vmatprep.subr.mxu0 0.0
    %v435 = vand.u32 %v54, 4294901760
    %436 = vmatpush1.msra.mxu0 %v435
    %437 = vmatprep.subr.mxu0 0.0
    %v438 = vand.u32 %v55, 4294901760
    %439 = vmatpush1.msra.mxu0 %v438
    %440 = vmatprep.subr.mxu0 0.0
    %v441 = vand.u32 %v56, 4294901760
    %442 = vmatpush1.msra.mxu0 %v441
    %443 = vmatprep.subr.mxu0 0.0
    %v444 = vand.u32 %v57, 4294901760
    %445 = vmatpush1.msra.mxu0 %v444
    %446 = vmatprep.subr.mxu0 0.0
    %v447 = vand.u32 %v58, 4294901760
    %448 = vmatpush1.msra.mxu0 %v447
    %449 = vmatprep.subr.mxu0 0.0
    %v450 = vand.u32 %v59, 4294901760
    %451 = vmatpush1.msra.mxu0 %v450
    %452 = vmatprep.subr.mxu0 0.0
    %v453 = vand.u32 %v60, 4294901760
    %454 = vmatpush1.msra.mxu0 %v453
    %455 = vmatprep.subr.mxu0 0.0
    %456 = vmatpush1.msra.mxu0 0.0
    %457 = vmatprep.subr.mxu0 0.0
    %458 = vmatpush1.msra.mxu0 0.0
    %459 = vmatprep.subr.mxu0 0.0
    %460 = vmatpush1.msra.mxu0 0.0
    %461 = vmatprep.subr.mxu0 0.0
    %462 = vmatpush1.msra.mxu0 0.0
    %463 = vmatprep.subr.mxu0 0.0
    %464 = vmatpush1.msra.mxu0 0.0
    %465 = vmatprep.subr.mxu0 0.0
    %466 = vmatpush1.msra.mxu0 0.0
    %467 = vmatprep.subr.mxu0 0.0
    %468 = vmatpush1.msra.mxu0 0.0
    %469 = vmatprep.subr.mxu0 0.0
    %470 = vmatpush1.msra.mxu0 0.0
    %471 = vmatprep.subr.mxu0 0.0
    %472 = vmatpush1.msra.mxu0 0.0
    %473 = vmatprep.subr.mxu0 0.0
    %474 = vmatpush1.msra.mxu0 0.0
    %475 = vmatprep.subr.mxu0 0.0
    %476 = vmatpush1.msra.mxu0 0.0
    %477 = vmatprep.subr.mxu0 0.0
    %478 = vmatpush1.msra.mxu0 0.0
    %479 = vmatprep.subr.mxu0 0.0
    %480 = vmatpush1.msra.mxu0 0.0
    %481 = vmatprep.subr.mxu0 0.0
    %482 = vmatpush1.msra.mxu0 0.0
    %483 = vmatprep.subr.mxu0 0.0
    %484 = vmatpush1.msra.mxu0 0.0
    %485 = vmatprep.subr.mxu0 0.0
    %486 = vmatpush1.msra.mxu0 0.0
    %487 = vmatprep.mubr.f32.mxu0 0.0
    %v488 = vand.u32 %v44, 4294901760
    %v489 = vsub.f32 %v44, %v488
    %v490 = vand.u32 %v489, 4294901760
    %491 = vmatmul.mubr.f32.gmra.mrb[0].mxu0 %v490
    %v492 = vpop.f32.mrb[0].mxu0
    %v493 = vadd.f32 %v404, %v492
    %v494 = vpop.f32.mrb[0].mxu0
    %495 = vdwg.mxu0
    %496 = vmatprep.subr.mxu0 0.0
    %v497 = vand.u32 %v45, 4294901760
    %v498 = vsub.f32 %v45, %v497
    %v499 = vand.u32 %v498, 4294901760
    %500 = vmatpush1.msra.mxu0 %v499
    %501 = vmatprep.subr.mxu0 0.0
    %v502 = vand.u32 %v46, 4294901760
    %v503 = vsub.f32 %v46, %v502
    %v504 = vand.u32 %v503, 4294901760
    %505 = vmatpush1.msra.mxu0 %v504
    %506 = vmatprep.subr.mxu0 0.0
    %v507 = vand.u32 %v47, 4294901760
    %v508 = vsub.f32 %v47, %v507
    %v509 = vand.u32 %v508, 4294901760
    %510 = vmatpush1.msra.mxu0 %v509
    %511 = vmatprep.subr.mxu0 0.0
    %v512 = vand.u32 %v48, 4294901760
    %v513 = vsub.f32 %v48, %v512
    %v514 = vand.u32 %v513, 4294901760
    %515 = vmatpush1.msra.mxu0 %v514
    %516 = vmatprep.subr.mxu0 0.0
    %v517 = vand.u32 %v49, 4294901760
    %v518 = vsub.f32 %v49, %v517
    %v519 = vand.u32 %v518, 4294901760
    %520 = vmatpush1.msra.mxu0 %v519
    %521 = vmatprep.subr.mxu0 0.0
    %v522 = vand.u32 %v50, 4294901760
    %v523 = vsub.f32 %v50, %v522
    %v524 = vand.u32 %v523, 4294901760
    %525 = vmatpush1.msra.mxu0 %v524
    %526 = vmatprep.subr.mxu0 0.0
    %v527 = vand.u32 %v51, 4294901760
    %v528 = vsub.f32 %v51, %v527
    %v529 = vand.u32 %v528, 4294901760
    %530 = vmatpush1.msra.mxu0 %v529
    %531 = vmatprep.subr.mxu0 0.0
    %v532 = vand.u32 %v52, 4294901760
    %v533 = vsub.f32 %v52, %v532
    %v534 = vand.u32 %v533, 4294901760
    %535 = vmatpush1.msra.mxu0 %v534
    %536 = vmatprep.subr.mxu0 0.0
    %v537 = vand.u32 %v53, 4294901760
    %v538 = vsub.f32 %v53, %v537
    %v539 = vand.u32 %v538, 4294901760
    %540 = vmatpush1.msra.mxu0 %v539
    %541 = vmatprep.subr.mxu0 0.0
    %v542 = vand.u32 %v54, 4294901760
    %v543 = vsub.f32 %v54, %v542
    %v544 = vand.u32 %v543, 4294901760
    %545 = vmatpush1.msra.mxu0 %v544
    %546 = vmatprep.subr.mxu0 0.0
    %v547 = vand.u32 %v55, 4294901760
    %v548 = vsub.f32 %v55, %v547
    %v549 = vand.u32 %v548, 4294901760
    %550 = vmatpush1.msra.mxu0 %v549
    %551 = vmatprep.subr.mxu0 0.0
    %v552 = vand.u32 %v56, 4294901760
    %v553 = vsub.f32 %v56, %v552
    %v554 = vand.u32 %v553, 4294901760
    %555 = vmatpush1.msra.mxu0 %v554
    %556 = vmatprep.subr.mxu0 0.0
    %v557 = vand.u32 %v57, 4294901760
    %v558 = vsub.f32 %v57, %v557
    %v559 = vand.u32 %v558, 4294901760
    %560 = vmatpush1.msra.mxu0 %v559
    %561 = vmatprep.subr.mxu0 0.0
    %v562 = vand.u32 %v58, 4294901760
    %v563 = vsub.f32 %v58, %v562
    %v564 = vand.u32 %v563, 4294901760
    %565 = vmatpush1.msra.mxu0 %v564
    %566 = vmatprep.subr.mxu0 0.0
    %v567 = vand.u32 %v59, 4294901760
    %v568 = vsub.f32 %v59, %v567
    %v569 = vand.u32 %v568, 4294901760
    %570 = vmatpush1.msra.mxu0 %v569
    %571 = vmatprep.subr.mxu0 0.0
    %v572 = vand.u32 %v60, 4294901760
    %v573 = vsub.f32 %v60, %v572
    %v574 = vand.u32 %v573, 4294901760
    %575 = vmatpush1.msra.mxu0 %v574
    %576 = vmatprep.subr.mxu0 0.0
    %577 = vmatpush1.msra.mxu0 0.0
    %578 = vmatprep.subr.mxu0 0.0
    %579 = vmatpush1.msra.mxu0 0.0
    %580 = vmatprep.subr.mxu0 0.0
    %581 = vmatpush1.msra.mxu0 0.0
    %582 = vmatprep.subr.mxu0 0.0
    %583 = vmatpush1.msra.mxu0 0.0
    %584 = vmatprep.subr.mxu0 0.0
    %585 = vmatpush1.msra.mxu0 0.0
    %586 = vmatprep.subr.mxu0 0.0
    %587 = vmatpush1.msra.mxu0 0.0
    %588 = vmatprep.subr.mxu0 0.0
    %589 = vmatpush1.msra.mxu0 0.0
    %590 = vmatprep.subr.mxu0 0.0
    %591 = vmatpush1.msra.mxu0 0.0
    %592 = vmatprep.subr.mxu0 0.0
    %593 = vmatpush1.msra.mxu0 0.0
    %594 = vmatprep.subr.mxu0 0.0
    %595 = vmatpush1.msra.mxu0 0.0
    %596 = vmatprep.subr.mxu0 0.0
    %597 = vmatpush1.msra.mxu0 0.0
    %598 = vmatprep.subr.mxu0 0.0
    %599 = vmatpush1.msra.mxu0 0.0
    %600 = vmatprep.subr.mxu0 0.0
    %601 = vmatpush1.msra.mxu0 0.0
    %602 = vmatprep.subr.mxu0 0.0
    %603 = vmatpush1.msra.mxu0 0.0
    %604 = vmatprep.subr.mxu0 0.0
    %605 = vmatpush1.msra.mxu0 0.0
    %606 = vmatprep.subr.mxu0 0.0
    %607 = vmatpush1.msra.mxu0 0.0
    %608 = vmatprep.mubr.f32.mxu0 0.0
    %v609 = vand.u32 %v44, 4294901760
    %610 = vmatmul.mubr.f32.gmra.mrb[0].mxu0 %v609
    %v611 = vpop.f32.mrb[0].mxu0
    %v612 = vadd.f32 %v493, %v611
    %v613 = vpop.f32.mrb[0].mxu0
    %614 = vdwg.mxu0
    %615 = vmatprep.subr.mxu0 0.0
    %v616 = vand.u32 %v45, 4294901760
    %617 = vmatpush1.msra.mxu0 %v616
    %618 = vmatprep.subr.mxu0 0.0
    %v619 = vand.u32 %v46, 4294901760
    %620 = vmatpush1.msra.mxu0 %v619
    %621 = vmatprep.subr.mxu0 0.0
    %v622 = vand.u32 %v47, 4294901760
    %623 = vmatpush1.msra.mxu0 %v622
    %624 = vmatprep.subr.mxu0 0.0
    %v625 = vand.u32 %v48, 4294901760
    %626 = vmatpush1.msra.mxu0 %v625
    %627 = vmatprep.subr.mxu0 0.0
    %v628 = vand.u32 %v49, 4294901760
    %629 = vmatpush1.msra.mxu0 %v628
    %630 = vmatprep.subr.mxu0 0.0
    %v631 = vand.u32 %v50, 4294901760
    %632 = vmatpush1.msra.mxu0 %v631
    %633 = vmatprep.subr.mxu0 0.0
    %v634 = vand.u32 %v51, 4294901760
    %635 = vmatpush1.msra.mxu0 %v634
    %636 = vmatprep.subr.mxu0 0.0
    %v637 = vand.u32 %v52, 4294901760
    %638 = vmatpush1.msra.mxu0 %v637
    %639 = vmatprep.subr.mxu0 0.0
    %v640 = vand.u32 %v53, 4294901760
    %641 = vmatpush1.msra.mxu0 %v640
    %642 = vmatprep.subr.mxu0 0.0
    %v643 = vand.u32 %v54, 4294901760
    %644 = vmatpush1.msra.mxu0 %v643
    %645 = vmatprep.subr.mxu0 0.0
    %v646 = vand.u32 %v55, 4294901760
    %647 = vmatpush1.msra.mxu0 %v646
    %648 = vmatprep.subr.mxu0 0.0
    %v649 = vand.u32 %v56, 4294901760
    %650 = vmatpush1.msra.mxu0 %v649
    %651 = vmatprep.subr.mxu0 0.0
    %v652 = vand.u32 %v57, 4294901760
    %653 = vmatpush1.msra.mxu0 %v652
    %654 = vmatprep.subr.mxu0 0.0
    %v655 = vand.u32 %v58, 4294901760
    %656 = vmatpush1.msra.mxu0 %v655
    %657 = vmatprep.subr.mxu0 0.0
    %v658 = vand.u32 %v59, 4294901760
    %659 = vmatpush1.msra.mxu0 %v658
    %660 = vmatprep.subr.mxu0 0.0
    %v661 = vand.u32 %v60, 4294901760
    %662 = vmatpush1.msra.mxu0 %v661
    %663 = vmatprep.subr.mxu0 0.0
    %664 = vmatpush1.msra.mxu0 0.0
    %665 = vmatprep.subr.mxu0 0.0
    %666 = vmatpush1.msra.mxu0 0.0
    %667 = vmatprep.subr.mxu0 0.0
    %668 = vmatpush1.msra.mxu0 0.0
    %669 = vmatprep.subr.mxu0 0.0
    %670 = vmatpush1.msra.mxu0 0.0
    %671 = vmatprep.subr.mxu0 0.0
    %672 = vmatpush1.msra.mxu0 0.0
    %673 = vmatprep.subr.mxu0 0.0
    %674 = vmatpush1.msra.mxu0 0.0
    %675 = vmatprep.subr.mxu0 0.0
    %676 = vmatpush1.msra.mxu0 0.0
    %677 = vmatprep.subr.mxu0 0.0
    %678 = vmatpush1.msra.mxu0 0.0
    %679 = vmatprep.subr.mxu0 0.0
    %680 = vmatpush1.msra.mxu0 0.0
    %681 = vmatprep.subr.mxu0 0.0
    %682 = vmatpush1.msra.mxu0 0.0
    %683 = vmatprep.subr.mxu0 0.0
    %684 = vmatpush1.msra.mxu0 0.0
    %685 = vmatprep.subr.mxu0 0.0
    %686 = vmatpush1.msra.mxu0 0.0
    %687 = vmatprep.subr.mxu0 0.0
    %688 = vmatpush1.msra.mxu0 0.0
    %689 = vmatprep.subr.mxu0 0.0
    %690 = vmatpush1.msra.mxu0 0.0
    %691 = vmatprep.subr.mxu0 0.0
    %692 = vmatpush1.msra.mxu0 0.0
    %693 = vmatprep.subr.mxu0 0.0
    %694 = vmatpush1.msra.mxu0 0.0
    %695 = vmatprep.mubr.f32.mxu0 0.0
    %v696 = vand.u32 %v44, 4294901760
    %697 = vmatmul.mubr.f32.gmra.mrb[0].mxu0 %v696
    %v698 = vpop.f32.mrb[0].mxu0
    %v699 = vadd.f32 %v612, %v698
    %v700 = vpop.f32.mrb[0].mxu0
    %701 = vdwg.mxu0
    %v702 = vmul.f32 %v44, %v44
    %703 = vmatprep.subr.mxu0 0.0
    %v704 = vand.u32 %v45, 4294901760
    %705 = vmatpush1.msra.mxu0 %v704
    %706 = vmatprep.subr.mxu0 0.0
    %v707 = vand.u32 %v46, 4294901760
    %708 = vmatpush1.msra.mxu0 %v707
    %709 = vmatprep.subr.mxu0 0.0
    %v710 = vand.u32 %v47, 4294901760
    %711 = vmatpush1.msra.mxu0 %v710
    %712 = vmatprep.subr.mxu0 0.0
    %v713 = vand.u32 %v48, 4294901760
    %714 = vmatpush1.msra.mxu0 %v713
    %715 = vmatprep.subr.mxu0 0.0
    %v716 = vand.u32 %v49, 4294901760
    %717 = vmatpush1.msra.mxu0 %v716
    %718 = vmatprep.subr.mxu0 0.0
    %v719 = vand.u32 %v50, 4294901760
    %720 = vmatpush1.msra.mxu0 %v719
    %721 = vmatprep.subr.mxu0 0.0
    %v722 = vand.u32 %v51, 4294901760
    %723 = vmatpush1.msra.mxu0 %v722
    %724 = vmatprep.subr.mxu0 0.0
    %v725 = vand.u32 %v52, 4294901760
    %726 = vmatpush1.msra.mxu0 %v725
    %727 = vmatprep.subr.mxu0 0.0
    %v728 = vand.u32 %v53, 4294901760
    %729 = vmatpush1.msra.mxu0 %v728
    %730 = vmatprep.subr.mxu0 0.0
    %v731 = vand.u32 %v54, 4294901760
    %732 = vmatpush1.msra.mxu0 %v731
    %733 = vmatprep.subr.mxu0 0.0
    %v734 = vand.u32 %v55, 4294901760
    %735 = vmatpush1.msra.mxu0 %v734
    %736 = vmatprep.subr.mxu0 0.0
    %v737 = vand.u32 %v56, 4294901760
    %738 = vmatpush1.msra.mxu0 %v737
    %739 = vmatprep.subr.mxu0 0.0
    %v740 = vand.u32 %v57, 4294901760
    %741 = vmatpush1.msra.mxu0 %v740
    %742 = vmatprep.subr.mxu0 0.0
    %v743 = vand.u32 %v58, 4294901760
    %744 = vmatpush1.msra.mxu0 %v743
    %745 = vmatprep.subr.mxu0 0.0
    %v746 = vand.u32 %v59, 4294901760
    %747 = vmatpush1.msra.mxu0 %v746
    %748 = vmatprep.subr.mxu0 0.0
    %v749 = vand.u32 %v60, 4294901760
    %750 = vmatpush1.msra.mxu0 %v749
    %751 = vmatprep.subr.mxu0 0.0
    %752 = vmatpush1.msra.mxu0 0.0
    %753 = vmatprep.subr.mxu0 0.0
    %754 = vmatpush1.msra.mxu0 0.0
    %755 = vmatprep.subr.mxu0 0.0
    %756 = vmatpush1.msra.mxu0 0.0
    %757 = vmatprep.subr.mxu0 0.0
    %758 = vmatpush1.msra.mxu0 0.0
    %759 = vmatprep.subr.mxu0 0.0
    %760 = vmatpush1.msra.mxu0 0.0
    %761 = vmatprep.subr.mxu0 0.0
    %762 = vmatpush1.msra.mxu0 0.0
    %763 = vmatprep.subr.mxu0 0.0
    %764 = vmatpush1.msra.mxu0 0.0
    %765 = vmatprep.subr.mxu0 0.0
    %766 = vmatpush1.msra.mxu0 0.0
    %767 = vmatprep.subr.mxu0 0.0
    %768 = vmatpush1.msra.mxu0 0.0
    %769 = vmatprep.subr.mxu0 0.0
    %770 = vmatpush1.msra.mxu0 0.0
    %771 = vmatprep.subr.mxu0 0.0
    %772 = vmatpush1.msra.mxu0 0.0
    %773 = vmatprep.subr.mxu0 0.0
    %774 = vmatpush1.msra.mxu0 0.0
    %775 = vmatprep.subr.mxu0 0.0
    %776 = vmatpush1.msra.mxu0 0.0
    %777 = vmatprep.subr.mxu0 0.0
    %778 = vmatpush1.msra.mxu0 0.0
    %779 = vmatprep.subr.mxu0 0.0
    %780 = vmatpush1.msra.mxu0 0.0
    %781 = vmatprep.subr.mxu0 0.0
    %782 = vmatpush1.msra.mxu0 0.0
    %783 = vmatprep.mubr.f32.mxu0 0.0
    %v784 = vand.u32 %v702, 4294901760
    %v785 = vsub.f32 %v702, %v784
    %v786 = vand.u32 %v785, 4294901760
    %v787 = vsub.f32 %v785, %v786
    %v788 = vand.u32 %v787, 4294901760
    %789 = vmatmul.mubr.f32.gmra.mrb[0].mxu0 %v788
    %v790 = vpop.f32.mrb[0].mxu0
    %v791 = vadd.f32 0.0, %v790
    %v792 = vpop.f32.mrb[0].mxu0
    %793 = vdwg.mxu0
    %794 = vmatprep.subr.mxu0 0.0
    %v795 = vand.u32 %v45, 4294901760
    %v796 = vsub.f32 %v45, %v795
    %v797 = vand.u32 %v796, 4294901760
    %v798 = vsub.f32 %v796, %v797
    %v799 = vand.u32 %v798, 4294901760
    %800 = vmatpush1.msra.mxu0 %v799
    %801 = vmatprep.subr.mxu0 0.0
    %v802 = vand.u32 %v46, 4294901760
    %v803 = vsub.f32 %v46, %v802
    %v804 = vand.u32 %v803, 4294901760
    %v805 = vsub.f32 %v803, %v804
    %v806 = vand.u32 %v805, 4294901760
    %807 = vmatpush1.msra.mxu0 %v806
    %808 = vmatprep.subr.mxu0 0.0
    %v809 = vand.u32 %v47, 4294901760
    %v810 = vsub.f32 %v47, %v809
    %v811 = vand.u32 %v810, 4294901760
    %v812 = vsub.f32 %v810, %v811
    %v813 = vand.u32 %v812, 4294901760
    %814 = vmatpush1.msra.mxu0 %v813
    %815 = vmatprep.subr.mxu0 0.0
    %v816 = vand.u32 %v48, 4294901760
    %v817 = vsub.f32 %v48, %v816
    %v818 = vand.u32 %v817, 4294901760
    %v819 = vsub.f32 %v817, %v818
    %v820 = vand.u32 %v819, 4294901760
    %821 = vmatpush1.msra.mxu0 %v820
    %822 = vmatprep.subr.mxu0 0.0
    %v823 = vand.u32 %v49, 4294901760
    %v824 = vsub.f32 %v49, %v823
    %v825 = vand.u32 %v824, 4294901760
    %v826 = vsub.f32 %v824, %v825
    %v827 = vand.u32 %v826, 4294901760
    %828 = vmatpush1.msra.mxu0 %v827
    %829 = vmatprep.subr.mxu0 0.0
    %v830 = vand.u32 %v50, 4294901760
    %v831 = vsub.f32 %v50, %v830
    %v832 = vand.u32 %v831, 4294901760
    %v833 = vsub.f32 %v831, %v832
    %v834 = vand.u32 %v833, 4294901760
    %835 = vmatpush1.msra.mxu0 %v834
    %836 = vmatprep.subr.mxu0 0.0
    %v837 = vand.u32 %v51, 4294901760
    %v838 = vsub.f32 %v51, %v837
    %v839 = vand.u32 %v838, 4294901760
    %v840 = vsub.f32 %v838, %v839
    %v841 = vand.u32 %v840, 4294901760
    %842 = vmatpush1.msra.mxu0 %v841
    %843 = vmatprep.subr.mxu0 0.0
    %v844 = vand.u32 %v52, 4294901760
    %v845 = vsub.f32 %v52, %v844
    %v846 = vand.u32 %v845, 4294901760
    %v847 = vsub.f32 %v845, %v846
    %v848 = vand.u32 %v847, 4294901760
    %849 = vmatpush1.msra.mxu0 %v848
    %850 = vmatprep.subr.mxu0 0.0
    %v851 = vand.u32 %v53, 4294901760
    %v852 = vsub.f32 %v53, %v851
    %v853 = vand.u32 %v852, 4294901760
    %v854 = vsub.f32 %v852, %v853
    %v855 = vand.u32 %v854, 4294901760
    %856 = vmatpush1.msra.mxu0 %v855
    %857 = vmatprep.subr.mxu0 0.0
    %v858 = vand.u32 %v54, 4294901760
    %v859 = vsub.f32 %v54, %v858
    %v860 = vand.u32 %v859, 4294901760
    %v861 = vsub.f32 %v859, %v860
    %v862 = vand.u32 %v861, 4294901760
    %863 = vmatpush1.msra.mxu0 %v862
    %864 = vmatprep.subr.mxu0 0.0
    %v865 = vand.u32 %v55, 4294901760
    %v866 = vsub.f32 %v55, %v865
    %v867 = vand.u32 %v866, 4294901760
    %v868 = vsub.f32 %v866, %v867
    %v869 = vand.u32 %v868, 4294901760
    %870 = vmatpush1.msra.mxu0 %v869
    %871 = vmatprep.subr.mxu0 0.0
    %v872 = vand.u32 %v56, 4294901760
    %v873 = vsub.f32 %v56, %v872
    %v874 = vand.u32 %v873, 4294901760
    %v875 = vsub.f32 %v873, %v874
    %v876 = vand.u32 %v875, 4294901760
    %877 = vmatpush1.msra.mxu0 %v876
    %878 = vmatprep.subr.mxu0 0.0
    %v879 = vand.u32 %v57, 4294901760
    %v880 = vsub.f32 %v57, %v879
    %v881 = vand.u32 %v880, 4294901760
    %v882 = vsub.f32 %v880, %v881
    %v883 = vand.u32 %v882, 4294901760
    %884 = vmatpush1.msra.mxu0 %v883
    %885 = vmatprep.subr.mxu0 0.0
    %v886 = vand.u32 %v58, 4294901760
    %v887 = vsub.f32 %v58, %v886
    %v888 = vand.u32 %v887, 4294901760
    %v889 = vsub.f32 %v887, %v888
    %v890 = vand.u32 %v889, 4294901760
    %891 = vmatpush1.msra.mxu0 %v890
    %892 = vmatprep.subr.mxu0 0.0
    %v893 = vand.u32 %v59, 4294901760
    %v894 = vsub.f32 %v59, %v893
    %v895 = vand.u32 %v894, 4294901760
    %v896 = vsub.f32 %v894, %v895
    %v897 = vand.u32 %v896, 4294901760
    %898 = vmatpush1.msra.mxu0 %v897
    %899 = vmatprep.subr.mxu0 0.0
    %v900 = vand.u32 %v60, 4294901760
    %v901 = vsub.f32 %v60, %v900
    %v902 = vand.u32 %v901, 4294901760
    %v903 = vsub.f32 %v901, %v902
    %v904 = vand.u32 %v903, 4294901760
    %905 = vmatpush1.msra.mxu0 %v904
    %906 = vmatprep.subr.mxu0 0.0
    %907 = vmatpush1.msra.mxu0 0.0
    %908 = vmatprep.subr.mxu0 0.0
    %909 = vmatpush1.msra.mxu0 0.0
    %910 = vmatprep.subr.mxu0 0.0
    %911 = vmatpush1.msra.mxu0 0.0
    %912 = vmatprep.subr.mxu0 0.0
    %913 = vmatpush1.msra.mxu0 0.0
    %914 = vmatprep.subr.mxu0 0.0
    %915 = vmatpush1.msra.mxu0 0.0
    %916 = vmatprep.subr.mxu0 0.0
    %917 = vmatpush1.msra.mxu0 0.0
    %918 = vmatprep.subr.mxu0 0.0
    %919 = vmatpush1.msra.mxu0 0.0
    %920 = vmatprep.subr.mxu0 0.0
    %921 = vmatpush1.msra.mxu0 0.0
    %922 = vmatprep.subr.mxu0 0.0
    %923 = vmatpush1.msra.mxu0 0.0
    %924 = vmatprep.subr.mxu0 0.0
    %925 = vmatpush1.msra.mxu0 0.0
    %926 = vmatprep.subr.mxu0 0.0
    %927 = vmatpush1.msra.mxu0 0.0
    %928 = vmatprep.subr.mxu0 0.0
    %929 = vmatpush1.msra.mxu0 0.0
    %930 = vmatprep.subr.mxu0 0.0
    %931 = vmatpush1.msra.mxu0 0.0
    %932 = vmatprep.subr.mxu0 0.0
    %933 = vmatpush1.msra.mxu0 0.0
    %934 = vmatprep.subr.mxu0 0.0
    %935 = vmatpush1.msra.mxu0 0.0
    %936 = vmatprep.subr.mxu0 0.0
    %937 = vmatpush1.msra.mxu0 0.0
    %938 = vmatprep.mubr.f32.mxu0 0.0
    %v939 = vand.u32 %v702, 4294901760
    %940 = vmatmul.mubr.f32.gmra.mrb[0].mxu0 %v939
    %v941 = vpop.f32.mrb[0].mxu0
    %v942 = vadd.f32 %v791, %v941
    %v943 = vpop.f32.mrb[0].mxu0
    %944 = vdwg.mxu0
    %945 = vmatprep.subr.mxu0 0.0
    %v946 = vand.u32 %v45, 4294901760
    %v947 = vsub.f32 %v45, %v946
    %948 = vmatpush1.msra.mxu0 %v947
    %949 = vmatprep.subr.mxu0 0.0
    %v950 = vand.u32 %v46, 4294901760
    %v951 = vsub.f32 %v46, %v950
    %952 = vmatpush1.msra.mxu0 %v951
    %953 = vmatprep.subr.mxu0 0.0
    %v954 = vand.u32 %v47, 4294901760
    %v955 = vsub.f32 %v47, %v954
    %956 = vmatpush1.msra.mxu0 %v955
    %957 = vmatprep.subr.mxu0 0.0
    %v958 = vand.u32 %v48, 4294901760
    %v959 = vsub.f32 %v48, %v958
    %960 = vmatpush1.msra.mxu0 %v959
    %961 = vmatprep.subr.mxu0 0.0
    %v962 = vand.u32 %v49, 4294901760
    %v963 = vsub.f32 %v49, %v962
    %964 = vmatpush1.msra.mxu0 %v963
    %965 = vmatprep.subr.mxu0 0.0
    %v966 = vand.u32 %v50, 4294901760
    %v967 = vsub.f32 %v50, %v966
    %968 = vmatpush1.msra.mxu0 %v967
    %969 = vmatprep.subr.mxu0 0.0
    %v970 = vand.u32 %v51, 4294901760
    %v971 = vsub.f32 %v51, %v970
    %972 = vmatpush1.msra.mxu0 %v971
    %973 = vmatprep.subr.mxu0 0.0
    %v974 = vand.u32 %v52, 4294901760
    %v975 = vsub.f32 %v52, %v974
    %976 = vmatpush1.msra.mxu0 %v975
    %977 = vmatprep.subr.mxu0 0.0
    %v978 = vand.u32 %v53, 4294901760
    %v979 = vsub.f32 %v53, %v978
    %980 = vmatpush1.msra.mxu0 %v979
    %981 = vmatprep.subr.mxu0 0.0
    %v982 = vand.u32 %v54, 4294901760
    %v983 = vsub.f32 %v54, %v982
    %984 = vmatpush1.msra.mxu0 %v983
    %985 = vmatprep.subr.mxu0 0.0
    %v986 = vand.u32 %v55, 4294901760
    %v987 = vsub.f32 %v55, %v986
    %988 = vmatpush1.msra.mxu0 %v987
    %989 = vmatprep.subr.mxu0 0.0
    %v990 = vand.u32 %v56, 4294901760
    %v991 = vsub.f32 %v56, %v990
    %992 = vmatpush1.msra.mxu0 %v991
    %993 = vmatprep.subr.mxu0 0.0
    %v994 = vand.u32 %v57, 4294901760
    %v995 = vsub.f32 %v57, %v994
    %996 = vmatpush1.msra.mxu0 %v995
    %997 = vmatprep.subr.mxu0 0.0
    %v998 = vand.u32 %v58, 4294901760
    %v999 = vsub.f32 %v58, %v998
    %1000 = vmatpush1.msra.mxu0 %v999
    %1001 = vmatprep.subr.mxu0 0.0
    %v1002 = vand.u32 %v59, 4294901760
    %v1003 = vsub.f32 %v59, %v1002
    %1004 = vmatpush1.msra.mxu0 %v1003
    %1005 = vmatprep.subr.mxu0 0.0
    %v1006 = vand.u32 %v60, 4294901760
    %v1007 = vsub.f32 %v60, %v1006
    %1008 = vmatpush1.msra.mxu0 %v1007
    %1009 = vmatprep.subr.mxu0 0.0
    %1010 = vmatpush1.msra.mxu0 0.0
    %1011 = vmatprep.subr.mxu0 0.0
    %1012 = vmatpush1.msra.mxu0 0.0
    %1013 = vmatprep.subr.mxu0 0.0
    %1014 = vmatpush1.msra.mxu0 0.0
    %1015 = vmatprep.subr.mxu0 0.0
    %1016 = vmatpush1.msra.mxu0 0.0
    %1017 = vmatprep.subr.mxu0 0.0
    %1018 = vmatpush1.msra.mxu0 0.0
    %1019 = vmatprep.subr.mxu0 0.0
    %1020 = vmatpush1.msra.mxu0 0.0
    %1021 = vmatprep.subr.mxu0 0.0
    %1022 = vmatpush1.msra.mxu0 0.0
    %1023 = vmatprep.subr.mxu0 0.0
    %1024 = vmatpush1.msra.mxu0 0.0
    %1025 = vmatprep.subr.mxu0 0.0
    %1026 = vmatpush1.msra.mxu0 0.0
    %1027 = vmatprep.subr.mxu0 0.0
    %1028 = vmatpush1.msra.mxu0 0.0
    %1029 = vmatprep.subr.mxu0 0.0
    %1030 = vmatpush1.msra.mxu0 0.0
    %1031 = vmatprep.subr.mxu0 0.0
    %1032 = vmatpush1.msra.mxu0 0.0
    %1033 = vmatprep.subr.mxu0 0.0
    %1034 = vmatpush1.msra.mxu0 0.0
    %1035 = vmatprep.subr.mxu0 0.0
    %1036 = vmatpush1.msra.mxu0 0.0
    %1037 = vmatprep.subr.mxu0 0.0
    %1038 = vmatpush1.msra.mxu0 0.0
    %1039 = vmatprep.subr.mxu0 0.0
    %1040 = vmatpush1.msra.mxu0 0.0
    %1041 = vmatprep.mubr.f32.mxu0 0.0
    %v1042 = vand.u32 %v702, 4294901760
    %v1043 = vsub.f32 %v702, %v1042
    %1044 = vmatmul.mubr.f32.gmra.mrb[0].mxu0 %v1043
    %v1045 = vpop.f32.mrb[0].mxu0
    %v1046 = vadd.f32 %v942, %v1045
    %v1047 = vpop.f32.mrb[0].mxu0
    %1048 = vdwg.mxu0
    %1049 = vmatprep.subr.mxu0 0.0
    %v1050 = vand.u32 %v45, 4294901760
    %1051 = vmatpush1.msra.mxu0 %v1050
    %1052 = vmatprep.subr.mxu0 0.0
    %v1053 = vand.u32 %v46, 4294901760
    %1054 = vmatpush1.msra.mxu0 %v1053
    %1055 = vmatprep.subr.mxu0 0.0
    %v1056 = vand.u32 %v47, 4294901760
    %1057 = vmatpush1.msra.mxu0 %v1056
    %1058 = vmatprep.subr.mxu0 0.0
    %v1059 = vand.u32 %v48, 4294901760
    %1060 = vmatpush1.msra.mxu0 %v1059
    %1061 = vmatprep.subr.mxu0 0.0
    %v1062 = vand.u32 %v49, 4294901760
    %1063 = vmatpush1.msra.mxu0 %v1062
    %1064 = vmatprep.subr.mxu0 0.0
    %v1065 = vand.u32 %v50, 4294901760
    %1066 = vmatpush1.msra.mxu0 %v1065
    %1067 = vmatprep.subr.mxu0 0.0
    %v1068 = vand.u32 %v51, 4294901760
    %1069 = vmatpush1.msra.mxu0 %v1068
    %1070 = vmatprep.subr.mxu0 0.0
    %v1071 = vand.u32 %v52, 4294901760
    %1072 = vmatpush1.msra.mxu0 %v1071
    %1073 = vmatprep.subr.mxu0 0.0
    %v1074 = vand.u32 %v53, 4294901760
    %1075 = vmatpush1.msra.mxu0 %v1074
    %1076 = vmatprep.subr.mxu0 0.0
    %v1077 = vand.u32 %v54, 4294901760
    %1078 = vmatpush1.msra.mxu0 %v1077
    %1079 = vmatprep.subr.mxu0 0.0
    %v1080 = vand.u32 %v55, 4294901760
    %1081 = vmatpush1.msra.mxu0 %v1080
    %1082 = vmatprep.subr.mxu0 0.0
    %v1083 = vand.u32 %v56, 4294901760
    %1084 = vmatpush1.msra.mxu0 %v1083
    %1085 = vmatprep.subr.mxu0 0.0
    %v1086 = vand.u32 %v57, 4294901760
    %1087 = vmatpush1.msra.mxu0 %v1086
    %1088 = vmatprep.subr.mxu0 0.0
    %v1089 = vand.u32 %v58, 4294901760
    %1090 = vmatpush1.msra.mxu0 %v1089
    %1091 = vmatprep.subr.mxu0 0.0
    %v1092 = vand.u32 %v59, 4294901760
    %1093 = vmatpush1.msra.mxu0 %v1092
    %1094 = vmatprep.subr.mxu0 0.0
    %v1095 = vand.u32 %v60, 4294901760
    %1096 = vmatpush1.msra.mxu0 %v1095
    %1097 = vmatprep.subr.mxu0 0.0
    %1098 = vmatpush1.msra.mxu0 0.0
    %1099 = vmatprep.subr.mxu0 0.0
    %1100 = vmatpush1.msra.mxu0 0.0
    %1101 = vmatprep.subr.mxu0 0.0
    %1102 = vmatpush1.msra.mxu0 0.0
    %1103 = vmatprep.subr.mxu0 0.0
    %1104 = vmatpush1.msra.mxu0 0.0
    %1105 = vmatprep.subr.mxu0 0.0
    %1106 = vmatpush1.msra.mxu0 0.0
    %1107 = vmatprep.subr.mxu0 0.0
    %1108 = vmatpush1.msra.mxu0 0.0
    %1109 = vmatprep.subr.mxu0 0.0
    %1110 = vmatpush1.msra.mxu0 0.0
    %1111 = vmatprep.subr.mxu0 0.0
    %1112 = vmatpush1.msra.mxu0 0.0
    %1113 = vmatprep.subr.mxu0 0.0
    %1114 = vmatpush1.msra.mxu0 0.0
    %1115 = vmatprep.subr.mxu0 0.0
    %1116 = vmatpush1.msra.mxu0 0.0
    %1117 = vmatprep.subr.mxu0 0.0
    %1118 = vmatpush1.msra.mxu0 0.0
    %1119 = vmatprep.subr.mxu0 0.0
    %1120 = vmatpush1.msra.mxu0 0.0
    %1121 = vmatprep.subr.mxu0 0.0
    %1122 = vmatpush1.msra.mxu0 0.0
    %1123 = vmatprep.subr.mxu0 0.0
    %1124 = vmatpush1.msra.mxu0 0.0
    %1125 = vmatprep.subr.mxu0 0.0
    %1126 = vmatpush1.msra.mxu0 0.0
    %1127 = vmatprep.subr.mxu0 0.0
    %1128 = vmatpush1.msra.mxu0 0.0
    %1129 = vmatprep.mubr.f32.mxu0 0.0
    %v1130 = vand.u32 %v702, 4294901760
    %v1131 = vsub.f32 %v702, %v1130
    %v1132 = vand.u32 %v1131, 4294901760
    %1133 = vmatmul.mubr.f32.gmra.mrb[0].mxu0 %v1132
    %v1134 = vpop.f32.mrb[0].mxu0
    %v1135 = vadd.f32 %v1046, %v1134
    %v1136 = vpop.f32.mrb[0].mxu0
    %1137 = vdwg.mxu0
    %1138 = vmatprep.subr.mxu0 0.0
    %v1139 = vand.u32 %v45, 4294901760
    %v1140 = vsub.f32 %v45, %v1139
    %v1141 = vand.u32 %v1140, 4294901760
    %1142 = vmatpush1.msra.mxu0 %v1141
    %1143 = vmatprep.subr.mxu0 0.0
    %v1144 = vand.u32 %v46, 4294901760
    %v1145 = vsub.f32 %v46, %v1144
    %v1146 = vand.u32 %v1145, 4294901760
    %1147 = vmatpush1.msra.mxu0 %v1146
    %1148 = vmatprep.subr.mxu0 0.0
    %v1149 = vand.u32 %v47, 4294901760
    %v1150 = vsub.f32 %v47, %v1149
    %v1151 = vand.u32 %v1150, 4294901760
    %1152 = vmatpush1.msra.mxu0 %v1151
    %1153 = vmatprep.subr.mxu0 0.0
    %v1154 = vand.u32 %v48, 4294901760
    %v1155 = vsub.f32 %v48, %v1154
    %v1156 = vand.u32 %v1155, 4294901760
    %1157 = vmatpush1.msra.mxu0 %v1156
    %1158 = vmatprep.subr.mxu0 0.0
    %v1159 = vand.u32 %v49, 4294901760
    %v1160 = vsub.f32 %v49, %v1159
    %v1161 = vand.u32 %v1160, 4294901760
    %1162 = vmatpush1.msra.mxu0 %v1161
    %1163 = vmatprep.subr.mxu0 0.0
    %v1164 = vand.u32 %v50, 4294901760
    %v1165 = vsub.f32 %v50, %v1164
    %v1166 = vand.u32 %v1165, 4294901760
    %1167 = vmatpush1.msra.mxu0 %v1166
    %1168 = vmatprep.subr.mxu0 0.0
    %v1169 = vand.u32 %v51, 4294901760
    %v1170 = vsub.f32 %v51, %v1169
    %v1171 = vand.u32 %v1170, 4294901760
    %1172 = vmatpush1.msra.mxu0 %v1171
    %1173 = vmatprep.subr.mxu0 0.0
    %v1174 = vand.u32 %v52, 4294901760
    %v1175 = vsub.f32 %v52, %v1174
    %v1176 = vand.u32 %v1175, 4294901760
    %1177 = vmatpush1.msra.mxu0 %v1176
    %1178 = vmatprep.subr.mxu0 0.0
    %v1179 = vand.u32 %v53, 4294901760
    %v1180 = vsub.f32 %v53, %v1179
    %v1181 = vand.u32 %v1180, 4294901760
    %1182 = vmatpush1.msra.mxu0 %v1181
    %1183 = vmatprep.subr.mxu0 0.0
    %v1184 = vand.u32 %v54, 4294901760
    %v1185 = vsub.f32 %v54, %v1184
    %v1186 = vand.u32 %v1185, 4294901760
    %1187 = vmatpush1.msra.mxu0 %v1186
    %1188 = vmatprep.subr.mxu0 0.0
    %v1189 = vand.u32 %v55, 4294901760
    %v1190 = vsub.f32 %v55, %v1189
    %v1191 = vand.u32 %v1190, 4294901760
    %1192 = vmatpush1.msra.mxu0 %v1191
    %1193 = vmatprep.subr.mxu0 0.0
    %v1194 = vand.u32 %v56, 4294901760
    %v1195 = vsub.f32 %v56, %v1194
    %v1196 = vand.u32 %v1195, 4294901760
    %1197 = vmatpush1.msra.mxu0 %v1196
    %1198 = vmatprep.subr.mxu0 0.0
    %v1199 = vand.u32 %v57, 4294901760
    %v1200 = vsub.f32 %v57, %v1199
    %v1201 = vand.u32 %v1200, 4294901760
    %1202 = vmatpush1.msra.mxu0 %v1201
    %1203 = vmatprep.subr.mxu0 0.0
    %v1204 = vand.u32 %v58, 4294901760
    %v1205 = vsub.f32 %v58, %v1204
    %v1206 = vand.u32 %v1205, 4294901760
    %1207 = vmatpush1.msra.mxu0 %v1206
    %1208 = vmatprep.subr.mxu0 0.0
    %v1209 = vand.u32 %v59, 4294901760
    %v1210 = vsub.f32 %v59, %v1209
    %v1211 = vand.u32 %v1210, 4294901760
    %1212 = vmatpush1.msra.mxu0 %v1211
    %1213 = vmatprep.subr.mxu0 0.0
    %v1214 = vand.u32 %v60, 4294901760
    %v1215 = vsub.f32 %v60, %v1214
    %v1216 = vand.u32 %v1215, 4294901760
    %1217 = vmatpush1.msra.mxu0 %v1216
    %1218 = vmatprep.subr.mxu0 0.0
    %1219 = vmatpush1.msra.mxu0 0.0
    %1220 = vmatprep.subr.mxu0 0.0
    %1221 = vmatpush1.msra.mxu0 0.0
    %1222 = vmatprep.subr.mxu0 0.0
    %1223 = vmatpush1.msra.mxu0 0.0
    %1224 = vmatprep.subr.mxu0 0.0
    %1225 = vmatpush1.msra.mxu0 0.0
    %1226 = vmatprep.subr.mxu0 0.0
    %1227 = vmatpush1.msra.mxu0 0.0
    %1228 = vmatprep.subr.mxu0 0.0
    %1229 = vmatpush1.msra.mxu0 0.0
    %1230 = vmatprep.subr.mxu0 0.0
    %1231 = vmatpush1.msra.mxu0 0.0
    %1232 = vmatprep.subr.mxu0 0.0
    %1233 = vmatpush1.msra.mxu0 0.0
    %1234 = vmatprep.subr.mxu0 0.0
    %1235 = vmatpush1.msra.mxu0 0.0
    %1236 = vmatprep.subr.mxu0 0.0
    %1237 = vmatpush1.msra.mxu0 0.0
    %1238 = vmatprep.subr.mxu0 0.0
    %1239 = vmatpush1.msra.mxu0 0.0
    %1240 = vmatprep.subr.mxu0 0.0
    %1241 = vmatpush1.msra.mxu0 0.0
    %1242 = vmatprep.subr.mxu0 0.0
    %1243 = vmatpush1.msra.mxu0 0.0
    %1244 = vmatprep.subr.mxu0 0.0
    %1245 = vmatpush1.msra.mxu0 0.0
    %1246 = vmatprep.subr.mxu0 0.0
    %1247 = vmatpush1.msra.mxu0 0.0
    %1248 = vmatprep.subr.mxu0 0.0
    %1249 = vmatpush1.msra.mxu0 0.0
    %1250 = vmatprep.mubr.f32.mxu0 0.0
    %v1251 = vand.u32 %v702, 4294901760
    %1252 = vmatmul.mubr.f32.gmra.mrb[0].mxu0 %v1251
    %v1253 = vpop.f32.mrb[0].mxu0
    %v1254 = vadd.f32 %v1135, %v1253
    %v1255 = vpop.f32.mrb[0].mxu0
    %1256 = vdwg.mxu0
    %1257 = vmatprep.subr.mxu0 0.0
    %v1258 = vand.u32 %v45, 4294901760
    %1259 = vmatpush1.msra.mxu0 %v1258
    %1260 = vmatprep.subr.mxu0 0.0
    %v1261 = vand.u32 %v46, 4294901760
    %1262 = vmatpush1.msra.mxu0 %v1261
    %1263 = vmatprep.subr.mxu0 0.0
    %v1264 = vand.u32 %v47, 4294901760
    %1265 = vmatpush1.msra.mxu0 %v1264
    %1266 = vmatprep.subr.mxu0 0.0
    %v1267 = vand.u32 %v48, 4294901760
    %1268 = vmatpush1.msra.mxu0 %v1267
    %1269 = vmatprep.subr.mxu0 0.0
    %v1270 = vand.u32 %v49, 4294901760
    %1271 = vmatpush1.msra.mxu0 %v1270
    %1272 = vmatprep.subr.mxu0 0.0
    %v1273 = vand.u32 %v50, 4294901760
    %1274 = vmatpush1.msra.mxu0 %v1273
    %1275 = vmatprep.subr.mxu0 0.0
    %v1276 = vand.u32 %v51, 4294901760
    %1277 = vmatpush1.msra.mxu0 %v1276
    %1278 = vmatprep.subr.mxu0 0.0
    %v1279 = vand.u32 %v52, 4294901760
    %1280 = vmatpush1.msra.mxu0 %v1279
    %1281 = vmatprep.subr.mxu0 0.0
    %v1282 = vand.u32 %v53, 4294901760
    %1283 = vmatpush1.msra.mxu0 %v1282
    %1284 = vmatprep.subr.mxu0 0.0
    %v1285 = vand.u32 %v54, 4294901760
    %1286 = vmatpush1.msra.mxu0 %v1285
    %1287 = vmatprep.subr.mxu0 0.0
    %v1288 = vand.u32 %v55, 4294901760
    %1289 = vmatpush1.msra.mxu0 %v1288
    %1290 = vmatprep.subr.mxu0 0.0
    %v1291 = vand.u32 %v56, 4294901760
    %1292 = vmatpush1.msra.mxu0 %v1291
    %1293 = vmatprep.subr.mxu0 0.0
    %v1294 = vand.u32 %v57, 4294901760
    %1295 = vmatpush1.msra.mxu0 %v1294
    %1296 = vmatprep.subr.mxu0 0.0
    %v1297 = vand.u32 %v58, 4294901760
    %1298 = vmatpush1.msra.mxu0 %v1297
    %1299 = vmatprep.subr.mxu0 0.0
    %v1300 = vand.u32 %v59, 4294901760
    %1301 = vmatpush1.msra.mxu0 %v1300
    %1302 = vmatprep.subr.mxu0 0.0
    %v1303 = vand.u32 %v60, 4294901760
    %1304 = vmatpush1.msra.mxu0 %v1303
    %1305 = vmatprep.subr.mxu0 0.0
    %1306 = vmatpush1.msra.mxu0 0.0
    %1307 = vmatprep.subr.mxu0 0.0
    %1308 = vmatpush1.msra.mxu0 0.0
    %1309 = vmatprep.subr.mxu0 0.0
    %1310 = vmatpush1.msra.mxu0 0.0
    %1311 = vmatprep.subr.mxu0 0.0
    %1312 = vmatpush1.msra.mxu0 0.0
    %1313 = vmatprep.subr.mxu0 0.0
    %1314 = vmatpush1.msra.mxu0 0.0
    %1315 = vmatprep.subr.mxu0 0.0
    %1316 = vmatpush1.msra.mxu0 0.0
    %1317 = vmatprep.subr.mxu0 0.0
    %1318 = vmatpush1.msra.mxu0 0.0
    %1319 = vmatprep.subr.mxu0 0.0
    %1320 = vmatpush1.msra.mxu0 0.0
    %1321 = vmatprep.subr.mxu0 0.0
    %1322 = vmatpush1.msra.mxu0 0.0
    %1323 = vmatprep.subr.mxu0 0.0
    %1324 = vmatpush1.msra.mxu0 0.0
    %1325 = vmatprep.subr.mxu0 0.0
    %1326 = vmatpush1.msra.mxu0 0.0
    %1327 = vmatprep.subr.mxu0 0.0
    %1328 = vmatpush1.msra.mxu0 0.0
    %1329 = vmatprep.subr.mxu0 0.0
    %1330 = vmatpush1.msra.mxu0 0.0
    %1331 = vmatprep.subr.mxu0 0.0
    %1332 = vmatpush1.msra.mxu0 0.0
    %1333 = vmatprep.subr.mxu0 0.0
    %1334 = vmatpush1.msra.mxu0 0.0
    %1335 = vmatprep.subr.mxu0 0.0
    %1336 = vmatpush1.msra.mxu0 0.0
    %1337 = vmatprep.mubr.f32.mxu0 0.0
    %v1338 = vand.u32 %v702, 4294901760
    %1339 = vmatmul.mubr.f32.gmra.mrb[0].mxu0 %v1338
    %v1340 = vpop.f32.mrb[0].mxu0
    %v1341 = vadd.f32 %v1254, %v1340
    %v1342 = vpop.f32.mrb[0].mxu0
    %1343 = vdwg.mxu0
    %v1344 = vmul.f32 %v699, %v699
    %v1345 = vsub.f32 %v1341, %v1344
    %v1346 = vmul.f32 %v1345, 1.032258
    %v1347 = vmax.f32 %v1346, 0.0
    %v1348 = vrsqrt.pop %v1347
    %v1349 = vmul.f32 %v1347, %v1348
    %vm1350 = vcmp.eq.f32.partialorder %v1347, inf
    %v1351 = vsel %vm1350, %v1347, %v1349
    %vm1352 = vcmp.eq.f32.partialorder %v1347, 0.0
    %v1353 = vand.u32 %v1347, 2147483648
    %v1354 = vsel %vm1352, %v1353, %v1351
    %v1355 = vadd.f32 %v1354, 0.001
    %v1356 = vrcp.pop %v1355
    %v1357 = vsub.f32 %v44, %v699
    %v1358 = vmul.f32 %v1357, %v1356
    %v1359 = vld [vmem:[%s1] sm:$0x1]
    %v1361 = vlaneseq
    %v1362 = vshrl.u32 %v1361, 7
    %v1363 = vsub.s32 0, %v1362
    %v1364 = vrot.slane %v1359, %v1363
    %v1366 = vmul.f32 %v1358, %v1364
    %v1367 = vld [vmem:[%s2] sm:$0x1]
    %v1369 = vlaneseq
    %v1370 = vshrl.u32 %v1369, 7
    %v1371 = vsub.s32 0, %v1370
    %v1372 = vrot.slane %v1367, %v1371
    %v1374 = vadd.f32 %v1366, %v1372
    %1375 = vst [vmem:[#allocation7] sm:$0xf] %v1374
    // Predicated region
    $region26: #{tpu_custom_call.1} parent=1 // pred_check
      _
    $region27: #{tpu_custom_call.1} parent=1 // pred_check_branch
      %1377 = sbr.rel (0) target = $region29
    $region28: #{tpu_custom_call.1} parent=1 // pred_region
      %s1379 = ssub.s32 64, 64
      %1380 = vsyncadd [#allocation4], %s1379
      %s1382 = sshll.u32 [#allocation7], 4
      %s1383 = int_to_ptr.vmem [resolvable:$true] %s1382
      %1385 = dma.vmem_to_hbm [thread:$0]  %s1383, 64, %s4, [#allocation4]
    $region29: #{tpu_custom_call.1} parent=1 // pred_fallthru
      _
    // Predicated region
    $region30: #{tpu_custom_call.1} parent=1 // pred_check
      _
    $region31: #{tpu_custom_call.1} parent=1 // pred_check_branch
      %1387 = sbr.rel (0) target = $region33
    $region32: #{tpu_custom_call.1} parent=1 // pred_region
      %1388 = dma.done [#allocation4], 64
    $region33: #{tpu_custom_call.1} parent=1 // pred_fallthru
      _
    %1389 = vsyncpa [#allocation3], 1
    %1390 = vsyncpa [#allocation6], 1
    %1391 = vsyncpa [#allocation4], 1

</llo_original>
